<compile_context>
chip_gen: v5e
topology: v5e:2x2
jax: 0.10.0
libtpu: 0.0.40
codegen_flags: <defaults>
</compile_context>

<pallas_src>
import jax
import jax.numpy as jnp
from jax.experimental import pallas as pl
from jax.experimental.pallas import tpu as pltpu


def _a_compute_kernel(xi_ref, xj_ref, w1, b1, w2, b2, w3, b3, w4r, b4, o_ref):
    """One (T, T) tile of Adj for one batch element.

    xi_ref : (1, TI, F)  f32  rows of the tile
    xj_ref : (1, TJ, F)  f32  cols of the tile
    w1..w3 : (Cin, Cout) bf16 weights;  b1..b3 : (1, Cout) f32 biases
    w4r    : (1, C3)     f32  final 1-channel conv as a row vector
    b4     : (1, 1)      f32
    o_ref  : (1, TI, TJ) f32
    """
    i_blk = pl.program_id(1)
    j_blk = pl.program_id(2)

    # Adj is symmetric (|x_i - x_j| == |x_j - x_i|): only compute the block
    # upper triangle; the wrapper mirrors the rest.
    @pl.when(j_blk >= i_blk)
    def _compute():
        xi = xi_ref[0]                                    # (TI, F) f32
        xj = xj_ref[0]                                    # (TJ, F) f32
        ti, f = xi.shape
        tj = xj.shape[0]

        # pairwise |x_i - x_j| for this tile, flattened to an MXU-friendly 2-D block
        d = jnp.abs(xi[:, None, :] - xj[None, :, :])      # (TI, TJ, F) f32
        d2 = d.astype(jnp.bfloat16).reshape(ti * tj, f)   # (TI*TJ, F)  bf16

        h = jnp.dot(d2, w1[...], preferred_element_type=jnp.float32) + b1[...]
        h = jnp.maximum(h, 0.0).astype(jnp.bfloat16)
        h = jnp.dot(h, w2[...], preferred_element_type=jnp.float32) + b2[...]
        h = jnp.maximum(h, 0.0).astype(jnp.bfloat16)
        h = jnp.dot(h, w3[...], preferred_element_type=jnp.float32) + b3[...]
        h = jnp.maximum(h, 0.0)                           # (TI*TJ, C3) f32

        # final 1-channel 1x1 conv: VPU multiply + lane reduce (no 1-wide matmul)
        out = jnp.sum(h * w4r[...], axis=-1, keepdims=True) + b4[...]   # (TI*TJ, 1)
        o_ref[0] = out.reshape(ti, tj).astype(o_ref.dtype)

    @pl.when(j_blk < i_blk)
    def _skip():
        # mirrored by the wrapper; just write a defined value
        o_ref[...] = jnp.zeros(o_ref.shape, o_ref.dtype)


def a_compute(cat_feature, params, tile=128):
    """Pallas implementation of A_compute.forward.

    cat_feature: (B, N, F) float32
    params: dict with w1..w4 (Cin, Cout) float32 and b1..b4 (1, Cout) float32
    returns Adj_M: (B, N, N) float32
    """
    B, N, F = cat_feature.shape
    # tile must satisfy the (8,128) rule: multiple of 128 on the lane axis or
    # exactly the full extent
    T = tile if (N % tile == 0) else N

    w1 = params["w1"].astype(jnp.bfloat16)
    w2 = params["w2"].astype(jnp.bfloat16)
    w3 = params["w3"].astype(jnp.bfloat16)
    b1, b2, b3 = params["b1"], params["b2"], params["b3"]
    w4r = params["w4"].reshape(1, -1).astype(jnp.float32)   # (1, C3)
    b4 = params["b4"].reshape(1, 1).astype(jnp.float32)     # (1, 1)

    def full_spec(arr):
        zeros = (0,) * arr.ndim
        return pl.BlockSpec(arr.shape, lambda b, i, j: zeros)

    c1, c2, c3 = w1.shape[1], w2.shape[1], w3.shape[1]
    flops = 2 * B * N * N * (F * c1 + c1 * c2 + c2 * c3 + c3)
    bytes_accessed = (2 * cat_feature.size + B * N * N) * 4 \
        + sum(int(params[k].size) for k in params) * 4

    grid_spec = pltpu.PrefetchScalarGridSpec(
        num_scalar_prefetch=0,
        grid=(B, N // T, N // T),
        in_specs=[
            pl.BlockSpec((1, T, F), lambda b, i, j: (b, i, 0)),   # row tile
            pl.BlockSpec((1, T, F), lambda b, i, j: (b, j, 0)),   # col tile
            full_spec(w1), full_spec(b1),
            full_spec(w2), full_spec(b2),
            full_spec(w3), full_spec(b3),
            full_spec(w4r), full_spec(b4),
        ],
        out_specs=pl.BlockSpec((1, T, T), lambda b, i, j: (b, i, j)),
    )

    out = pl.pallas_call(
        _a_compute_kernel,
        out_shape=jax.ShapeDtypeStruct((B, N, N), jnp.float32),
        grid_spec=grid_spec,
        compiler_params=pltpu.CompilerParams(
            dimension_semantics=("parallel", "parallel", "parallel"),
            vmem_limit_bytes=64 * 1024 * 1024),
        cost_estimate=pl.CostEstimate(
            flops=int(flops), transcendentals=0,
            bytes_accessed=int(bytes_accessed)),
    )(cat_feature, cat_feature, w1, b1, w2, b2, w3, b3, w4r, b4)

    if N > T:
        # mirror the block lower triangle from the computed upper triangle
        blk = jnp.arange(N) // T
        computed = blk[:, None] <= blk[None, :]            # (N, N) bool
        out = jnp.where(computed[None, :, :], out, jnp.swapaxes(out, 1, 2))
    return out


def init_params(key, input_features, nf=64, ratio=(4, 2, 1)):
    """Deterministic synthetic parameters mirroring the nn.Conv2d(.., 1) stack."""
    c1, c2, c3 = int(nf * ratio[0]), int(nf * ratio[1]), int(nf * ratio[2])
    dims = [(input_features, c1), (c1, c2), (c2, c3), (c3, 1)]
    params = {}
    for idx, (cin, cout) in enumerate(dims, start=1):
        key, kw, kb = jax.random.split(key, 3)
        # PyTorch conv weight is (Cout, Cin, 1, 1); we store its transpose (Cin, Cout)
        params[f"w{idx}"] = 0.1 * jax.random.normal(kw, (cin, cout), jnp.float32)
        params[f"b{idx}"] = 0.1 * jax.random.normal(kb, (1, cout), jnp.float32)
    return params


def a_compute_ref(cat_feature, params, emulate_bf16=True):
    """Pure-JAX reference mirroring the PyTorch graph (optionally with the same
    bf16 matmul-operand rounding the kernel uses, so the check can be tight)."""
    x = cat_feature
    h = jnp.abs(x[:, :, None, :] - x[:, None, :, :])       # (B, N, N, F)
    for i in (1, 2, 3):
        w = params[f"w{i}"]
        if emulate_bf16:
            h = h.astype(jnp.bfloat16)
            w = w.astype(jnp.bfloat16)
        h = jnp.einsum("bnmf,fc->bnmc", h, w,
                       preferred_element_type=jnp.float32) + params[f"b{i}"][0]
        h = jnp.maximum(h, 0.0)
    h = jnp.sum(h * params["w4"][:, 0], axis=-1) + params["b4"][0, 0]
    return h                                                # (B, N, N)


if __name__ == "__main__":
    key = jax.random.PRNGKey(0)

    # (1) small single-tile case; (2) multi-tile case that exercises the
    # symmetry skip + mirror path (grid = (B, 2, 2))
    for (B, N, F, nf) in [(2, 8, 32, 16), (2, 256, 32, 16)]:
        key, kx, kp = jax.random.split(key, 3)
        cat_feature = jax.random.normal(kx, (B, N, F), jnp.float32)
        params = init_params(kp, input_features=F, nf=nf)

        out = jax.block_until_ready(a_compute(cat_feature, params))
        ref = a_compute_ref(cat_feature, params)

        assert out.shape == (B, N, N)
        assert jnp.allclose(out, jnp.swapaxes(out, 1, 2), atol=1e-5), "not symmetric"
        assert jnp.allclose(out, ref, atol=2e-3, rtol=2e-3), (
            f"max abs err {jnp.max(jnp.abs(out - ref))}")

    print("KERNEL_OK")
</pallas_src>

<mosaic_0001>
module attributes {stable_mosaic.version = 11 : i64} {
  func.func @_a_compute_kernel(%arg0: i32, %arg1: i32, %arg2: i32, %arg3: memref<1x8x32xf32, #tpu.memory_space<vmem>>, %arg4: memref<1x8x32xf32, #tpu.memory_space<vmem>>, %arg5: memref<32x64xbf16, #tpu.memory_space<vmem>>, %arg6: memref<1x64xf32, #tpu.memory_space<vmem>>, %arg7: memref<64x32xbf16, #tpu.memory_space<vmem>>, %arg8: memref<1x32xf32, #tpu.memory_space<vmem>>, %arg9: memref<32x16xbf16, #tpu.memory_space<vmem>>, %arg10: memref<1x16xf32, #tpu.memory_space<vmem>>, %arg11: memref<1x16xf32, #tpu.memory_space<vmem>>, %arg12: memref<1x1xf32, #tpu.memory_space<vmem>>, %arg13: memref<1x8x8xf32, #tpu.memory_space<vmem>>) attributes {dimension_semantics = [#tpu.dimension_semantics<parallel>, #tpu.dimension_semantics<parallel>, #tpu.dimension_semantics<parallel>], iteration_bounds = array<i64: 2, 1, 1>, scalar_prefetch = 0 : i64, scratch_operands = 0 : i64, tpu.core_type = #tpu.core_type<tc>, window_params = [{transform_indices = @transform_0, window_bounds = array<i64: 1, 8, 32>}, {transform_indices = @transform_1, window_bounds = array<i64: 1, 8, 32>}, {pipeline_mode = #tpu.pipeline_mode<synchronous>, transform_indices = @transform_2, window_bounds = array<i64: 32, 64>}, {pipeline_mode = #tpu.pipeline_mode<synchronous>, transform_indices = @transform_3, window_bounds = array<i64: 1, 64>}, {pipeline_mode = #tpu.pipeline_mode<synchronous>, transform_indices = @transform_4, window_bounds = array<i64: 64, 32>}, {pipeline_mode = #tpu.pipeline_mode<synchronous>, transform_indices = @transform_5, window_bounds = array<i64: 1, 32>}, {pipeline_mode = #tpu.pipeline_mode<synchronous>, transform_indices = @transform_6, window_bounds = array<i64: 32, 16>}, {pipeline_mode = #tpu.pipeline_mode<synchronous>, transform_indices = @transform_7, window_bounds = array<i64: 1, 16>}, {pipeline_mode = #tpu.pipeline_mode<synchronous>, transform_indices = @transform_8, window_bounds = array<i64: 1, 16>}, {pipeline_mode = #tpu.pipeline_mode<synchronous>, transform_indices = @transform_9, window_bounds = array<i64: 1, 1>}, {transform_indices = @transform_10, window_bounds = array<i64: 1, 8, 8>}]} {
    %0 = arith.cmpi sge, %arg2, %arg1 : i32
    %1 = arith.extui %0 : i1 to i32
    %c0_i32 = arith.constant 0 : i32
    %2 = arith.cmpi ne, %1, %c0_i32 : i32
    scf.if %2 {
      %c0 = arith.constant 0 : index
      %c0_1 = arith.constant 0 : index
      %c0_2 = arith.constant 0 : index
      %6 = vector.load %arg3[%c0, %c0_1, %c0_2] : memref<1x8x32xf32, #tpu.memory_space<vmem>>, vector<1x8x32xf32>
      %7 = vector.shape_cast %6 : vector<1x8x32xf32> to vector<8x32xf32>
      %c0_3 = arith.constant 0 : index
      %c0_4 = arith.constant 0 : index
      %c0_5 = arith.constant 0 : index
      %8 = vector.load %arg4[%c0_3, %c0_4, %c0_5] : memref<1x8x32xf32, #tpu.memory_space<vmem>>, vector<1x8x32xf32>
      %9 = vector.shape_cast %8 : vector<1x8x32xf32> to vector<8x32xf32>
      %10 = vector.shape_cast %7 : vector<8x32xf32> to vector<8x1x32xf32>
      %11 = vector.shape_cast %9 : vector<8x32xf32> to vector<1x8x32xf32>
      %12 = vector.broadcast %10 : vector<8x1x32xf32> to vector<8x8x32xf32>
      %13 = vector.broadcast %11 : vector<1x8x32xf32> to vector<8x8x32xf32>
      %14 = arith.subf %12, %13 : vector<8x8x32xf32>
      %15 = math.absf %14 : vector<8x8x32xf32>
      %16 = arith.truncf %15 : vector<8x8x32xf32> to vector<8x8x32xbf16>
      %17 = vector.shape_cast %16 : vector<8x8x32xbf16> to vector<64x32xbf16>
      %c0_6 = arith.constant 0 : index
      %c0_7 = arith.constant 0 : index
      %18 = vector.load %arg5[%c0_6, %c0_7] : memref<32x64xbf16, #tpu.memory_space<vmem>>, vector<32x64xbf16>
      %cst = arith.constant dense<0.000000e+00> : vector<64x64xf32>
      %19 = tpu.matmul %17, %18, %cst {dimension_numbers = #tpu.dot_dimension_numbers<[1], [0], [0], [1], [0, 0, 1, 1], [], []>} : vector<64x32xbf16>, vector<32x64xbf16>, vector<64x64xf32> -> vector<64x64xf32>
      %c0_8 = arith.constant 0 : index
      %c0_9 = arith.constant 0 : index
      %20 = vector.load %arg6[%c0_8, %c0_9] : memref<1x64xf32, #tpu.memory_space<vmem>>, vector<1x64xf32>
      %21 = vector.broadcast %20 : vector<1x64xf32> to vector<64x64xf32>
      %22 = arith.addf %19, %21 : vector<64x64xf32>
      %cst_10 = arith.constant 0.000000e+00 : f32
      %23 = vector.broadcast %cst_10 : f32 to vector<64x64xf32>
      %24 = arith.maximumf %22, %23 : vector<64x64xf32>
      %25 = arith.truncf %24 : vector<64x64xf32> to vector<64x64xbf16>
      %c0_11 = arith.constant 0 : index
      %c0_12 = arith.constant 0 : index
      %26 = vector.load %arg7[%c0_11, %c0_12] : memref<64x32xbf16, #tpu.memory_space<vmem>>, vector<64x32xbf16>
      %cst_13 = arith.constant dense<0.000000e+00> : vector<64x32xf32>
      %27 = tpu.matmul %25, %26, %cst_13 {dimension_numbers = #tpu.dot_dimension_numbers<[1], [0], [0], [1], [0, 0, 1, 1], [], []>} : vector<64x64xbf16>, vector<64x32xbf16>, vector<64x32xf32> -> vector<64x32xf32>
      %c0_14 = arith.constant 0 : index
      %c0_15 = arith.constant 0 : index
      %28 = vector.load %arg8[%c0_14, %c0_15] : memref<1x32xf32, #tpu.memory_space<vmem>>, vector<1x32xf32>
      %29 = vector.broadcast %28 : vector<1x32xf32> to vector<64x32xf32>
      %30 = arith.addf %27, %29 : vector<64x32xf32>
      %cst_16 = arith.constant 0.000000e+00 : f32
      %31 = vector.broadcast %cst_16 : f32 to vector<64x32xf32>
      %32 = arith.maximumf %30, %31 : vector<64x32xf32>
      %33 = arith.truncf %32 : vector<64x32xf32> to vector<64x32xbf16>
      %c0_17 = arith.constant 0 : index
      %c0_18 = arith.constant 0 : index
      %34 = vector.load %arg9[%c0_17, %c0_18] : memref<32x16xbf16, #tpu.memory_space<vmem>>, vector<32x16xbf16>
      %cst_19 = arith.constant dense<0.000000e+00> : vector<64x16xf32>
      %35 = tpu.matmul %33, %34, %cst_19 {dimension_numbers = #tpu.dot_dimension_numbers<[1], [0], [0], [1], [0, 0, 1, 1], [], []>} : vector<64x32xbf16>, vector<32x16xbf16>, vector<64x16xf32> -> vector<64x16xf32>
      %c0_20 = arith.constant 0 : index
      %c0_21 = arith.constant 0 : index
      %36 = vector.load %arg10[%c0_20, %c0_21] : memref<1x16xf32, #tpu.memory_space<vmem>>, vector<1x16xf32>
      %37 = vector.broadcast %36 : vector<1x16xf32> to vector<64x16xf32>
      %38 = arith.addf %35, %37 : vector<64x16xf32>
      %cst_22 = arith.constant 0.000000e+00 : f32
      %39 = vector.broadcast %cst_22 : f32 to vector<64x16xf32>
      %40 = arith.maximumf %38, %39 : vector<64x16xf32>
      %c0_23 = arith.constant 0 : index
      %c0_24 = arith.constant 0 : index
      %41 = vector.load %arg11[%c0_23, %c0_24] : memref<1x16xf32, #tpu.memory_space<vmem>>, vector<1x16xf32>
      %42 = vector.broadcast %41 : vector<1x16xf32> to vector<64x16xf32>
      %43 = arith.mulf %40, %42 : vector<64x16xf32>
      %cst_25 = arith.constant dense<0.000000e+00> : vector<64xf32>
      %44 = vector.multi_reduction <add>, %43, %cst_25 [1] : vector<64x16xf32> to vector<64xf32>
      %45 = vector.shape_cast %44 : vector<64xf32> to vector<64x1xf32>
      %c0_26 = arith.constant 0 : index
      %c0_27 = arith.constant 0 : index
      %46 = vector.load %arg12[%c0_26, %c0_27] : memref<1x1xf32, #tpu.memory_space<vmem>>, vector<1x1xf32>
      %47 = vector.broadcast %46 : vector<1x1xf32> to vector<64x1xf32>
      %48 = arith.addf %45, %47 : vector<64x1xf32>
      %49 = vector.shape_cast %48 : vector<64x1xf32> to vector<8x8xf32>
      %c0_28 = arith.constant 0 : index
      %c0_29 = arith.constant 0 : index
      %c0_30 = arith.constant 0 : index
      %50 = vector.load %arg13[%c0_28, %c0_29, %c0_30] : memref<1x8x8xf32, #tpu.memory_space<vmem>>, vector<1x8x8xf32>
      %51 = vector.shape_cast %50 : vector<1x8x8xf32> to vector<8x8xf32>
      %52 = vector.shape_cast %49 : vector<8x8xf32> to vector<1x8x8xf32>
      tpu.vector_store %arg13[%c0_28, %c0_29, %c0_30], %52 {strides = array<i32>} : memref<1x8x8xf32, #tpu.memory_space<vmem>>, vector<1x8x8xf32>,
    } else {
    }
    %3 = arith.cmpi slt, %arg2, %arg1 : i32
    %4 = arith.extui %3 : i1 to i32
    %c0_i32_0 = arith.constant 0 : i32
    %5 = arith.cmpi ne, %4, %c0_i32_0 : i32
    scf.if %5 {
      %cst = arith.constant 0.000000e+00 : f32
      %6 = vector.broadcast %cst : f32 to vector<1x8x8xf32>
      %c0 = arith.constant 0 : index
      %c0_1 = arith.constant 0 : index
      %c0_2 = arith.constant 0 : index
      %7 = vector.load %arg13[%c0, %c0_1, %c0_2] : memref<1x8x8xf32, #tpu.memory_space<vmem>>, vector<1x8x8xf32>
      tpu.vector_store %arg13[%c0, %c0_1, %c0_2], %6 {strides = array<i32>} : memref<1x8x8xf32, #tpu.memory_space<vmem>>, vector<1x8x8xf32>,
    } else {
    }
    return
  }
  func.func @transform_0(%arg0: i32, %arg1: i32, %arg2: i32) -> (i32, i32, i32) {
    %c0_i32 = arith.constant 0 : i32
    %c0_i32_0 = arith.constant 0 : i32
    return %arg0, %arg1, %c0_i32 : i32, i32, i32
  }
  func.func @transform_1(%arg0: i32, %arg1: i32, %arg2: i32) -> (i32, i32, i32) {
    %c0_i32 = arith.constant 0 : i32
    %c0_i32_0 = arith.constant 0 : i32
    return %arg0, %arg2, %c0_i32 : i32, i32, i32
  }
  func.func @transform_2(%arg0: i32, %arg1: i32, %arg2: i32) -> (i32, i32) {
    %c0_i32 = arith.constant 0 : i32
    %c0_i32_0 = arith.constant 0 : i32
    %c0_i32_1 = arith.constant 0 : i32
    return %c0_i32, %c0_i32_0 : i32, i32
  }
  func.func @transform_3(%arg0: i32, %arg1: i32, %arg2: i32) -> (i32, i32) {
    %c0_i32 = arith.constant 0 : i32
    %c0_i32_0 = arith.constant 0 : i32
    %c0_i32_1 = arith.constant 0 : i32
    return %c0_i32, %c0_i32_0 : i32, i32
  }
  func.func @transform_4(%arg0: i32, %arg1: i32, %arg2: i32) -> (i32, i32) {
    %c0_i32 = arith.constant 0 : i32
    %c0_i32_0 = arith.constant 0 : i32
    %c0_i32_1 = arith.constant 0 : i32
    return %c0_i32, %c0_i32_0 : i32, i32
  }
  func.func @transform_5(%arg0: i32, %arg1: i32, %arg2: i32) -> (i32, i32) {
    %c0_i32 = arith.constant 0 : i32
    %c0_i32_0 = arith.constant 0 : i32
    %c0_i32_1 = arith.constant 0 : i32
    return %c0_i32, %c0_i32_0 : i32, i32
  }
  func.func @transform_6(%arg0: i32, %arg1: i32, %arg2: i32) -> (i32, i32) {
    %c0_i32 = arith.constant 0 : i32
    %c0_i32_0 = arith.constant 0 : i32
    %c0_i32_1 = arith.constant 0 : i32
    return %c0_i32, %c0_i32_0 : i32, i32
  }
  func.func @transform_7(%arg0: i32, %arg1: i32, %arg2: i32) -> (i32, i32) {
    %c0_i32 = arith.constant 0 : i32
    %c0_i32_0 = arith.constant 0 : i32
    %c0_i32_1 = arith.constant 0 : i32
    return %c0_i32, %c0_i32_0 : i32, i32
  }
  func.func @transform_8(%arg0: i32, %arg1: i32, %arg2: i32) -> (i32, i32) {
    %c0_i32 = arith.constant 0 : i32
    %c0_i32_0 = arith.constant 0 : i32
    %c0_i32_1 = arith.constant 0 : i32
    return %c0_i32, %c0_i32_0 : i32, i32
  }
  func.func @transform_9(%arg0: i32, %arg1: i32, %arg2: i32) -> (i32, i32) {
    %c0_i32 = arith.constant 0 : i32
    %c0_i32_0 = arith.constant 0 : i32
    %c0_i32_1 = arith.constant 0 : i32
    return %c0_i32, %c0_i32_0 : i32, i32
  }
  func.func @transform_10(%arg0: i32, %arg1: i32, %arg2: i32) -> (i32, i32, i32) {
    %c0_i32 = arith.constant 0 : i32
    return %arg0, %arg1, %arg2 : i32, i32, i32
  }
}

</mosaic_0001>

<llo_original>
// kernel: tpu_custom_call.1
$region0: #{tpu_custom_call.1}
  #allocation0 [shape = 'u32[]', space=smem, size = 0x4, offset = 0x4, fixed_abs, tag = 'smem constant byte address 0x4 - core index']
  #allocation1 [shape = 'u32[72,128]{1,0:T(1,128)}', space=vmem, size = 0x9000, scoped, tag = 'internal scratch']
  #allocation2 [shape = 'f32[1,1]{1,0:T(1,128)S(1)}', space=vmem, size = 0x200, scoped, tag = 'scoped memory for tpu_custom_call.1']
  %s0 = inlined_call_operand.vmem [shape: f32[2,8,32], index: 0, kind: input, shape index: {}]
  %s1 = inlined_call_operand.vmem [shape: f32[2,8,32], index: 1, kind: input, shape index: {}]
  %s2 = inlined_call_operand.vmem [shape: bf16[32,64], index: 2, kind: input, shape index: {}]
  %s3 = inlined_call_operand.vmem [shape: f32[1,64], index: 3, kind: input, shape index: {}]
  %s4 = inlined_call_operand.vmem [shape: bf16[64,32], index: 4, kind: input, shape index: {}]
  %s5 = inlined_call_operand.vmem [shape: f32[1,32], index: 5, kind: input, shape index: {}]
  %s6 = inlined_call_operand.vmem [shape: bf16[32,16], index: 6, kind: input, shape index: {}]
  %s7 = inlined_call_operand.vmem [shape: f32[1,16], index: 7, kind: input, shape index: {}]
  %s8 = inlined_call_operand.vmem [shape: f32[1,16], index: 8, kind: input, shape index: {}]
  %s9 = inlined_call_operand.<no memory space> [shape: f32[1,1], index: 9, kind: input, shape index: {}]
  %s10 = inlined_call_operand.hbm [shape: f32[2,8,8], index: 10, kind: output, shape index: {}]
  %s11 = sld [smem:[#allocation0]]
  $region81: #{tpu_custom_call.1} parent=0
    _
  %s13 = ssub.s32 1, %s11
  %s14 = scalar_select 0, %s13, %s11
  %v15 = vstv %s9
  %16 = vst [vmem:[#allocation2] sm:$0x1] %v15
  $region1: #{tpu_custom_call.1} parent=0
    #allocation3 [shape = 'u8[8192]{0}', space=vmem, size = 0x2000, scoped, tag = 'output window, operand 0']
    #allocation4 [shape = 's32[2]{0}', space=sflag, size = 0x8, scoped, tag = 'scoped memory for tpu_custom_call.1']
    %17 = vsyncpa [#allocation4], 0
    %s18 = scalar_lea.sflag [#allocation4], 1
    %19 = vsyncpa %s18, 0
    loop: start=0, step=1, limit=4
    $region2: #{tpu_custom_call.1} parent=1 // loop_pre_header
      _
    $region3: #{tpu_custom_call.1} parent=1 // loop_header
      %s21 = sphi 0, %s25
      %p22 = scmp.ge.s32.totalorder %s21, 4
      %s28 = sphi 0, %s47
      %s29 = sphi 0, %s43
      %s30 = sphi 0, %s39
      %s31 = sphi 0, %s28
      %s32 = sphi 0, %s29
      %s33 = sphi 0, %s30
      %s34 = sphi 0, %s31
      %s35 = sphi 0, %s32
      %s36 = sphi 0, %s33
      %s52 = sphi 0, %s54
      %s55 = sphi 0, %s52
      %s56 = sphi 0, %s55
      %s72 = sphi 0, %s56
      %s80 = sphi 0, %s82
      %s83 = sphi 0, %s80
      %s84 = sphi 0, %s83
      %s100 = sphi 0, %s84
      %s104 = sphi 0, %s104
      %s106 = sphi 0, %s104
      %s107 = sphi 0, %s106
      %s121 = sphi 0, %s107
      %s125 = sphi 0, %s125
      %s127 = sphi 0, %s125
      %s128 = sphi 0, %s127
      %s142 = sphi 0, %s128
      %s146 = sphi 0, %s146
      %s148 = sphi 0, %s146
      %s149 = sphi 0, %s148
      %s163 = sphi 0, %s149
      %s167 = sphi 0, %s167
      %s169 = sphi 0, %s167
      %s170 = sphi 0, %s169
      %s184 = sphi 0, %s170
      %s188 = sphi 0, %s188
      %s190 = sphi 0, %s188
      %s191 = sphi 0, %s190
      %s205 = sphi 0, %s191
      %s209 = sphi 0, %s209
      %s211 = sphi 0, %s209
      %s212 = sphi 0, %s211
      %s226 = sphi 0, %s212
      %s230 = sphi 0, %s230
      %s232 = sphi 0, %s230
      %s233 = sphi 0, %s232
      %s247 = sphi 0, %s233
      %s251 = sphi 0, %s251
      %s253 = sphi 0, %s251
      %s254 = sphi 0, %s253
      %s268 = sphi 0, %s254
      %s278 = sphi 0, %s280
      %s281 = sphi 0, %s278
      %s282 = sphi 0, %s281
      %s298 = sphi 0, %s282
    $region4: #{tpu_custom_call.1} parent=1 // loop_header_branch
      %24 = sbr.rel (%p22) target = $region8
    $region5: #{tpu_custom_call.1} parent=1 // loop_body
      %s26 = ssub.s32 %s21, 1
      %s27 = ssub.s32 %s21, 2
      %s37 = sadd.s32 1, %s30
      %p38 = scmp.ge.s32.totalorder %s37, 1
      %s39 = scalar_select %p38, 0, %s37
      %s40 = sadd.s32 1, %s29
      %s41 = scalar_select %p38, %s40, %s29
      %p42 = scmp.ge.s32.totalorder %s41, 1
      %s43 = scalar_select %p42, 0, %s41
      %s44 = sadd.s32 1, %s28
      %s45 = scalar_select %p42, %s44, %s28
      %p46 = scmp.ge.s32.totalorder %s45, 2
      %s47 = scalar_select %p46, 0, %s45
      %s48 = ssub.s32 %s28, %s47
      %s49 = ssub.s32 %s29, %s43
      %s50 = sor.u32 %s48, %s49
      %p51 = scmp.eq.s32.totalorder %s50, 0
      %s53 = sadd.s32 %s52, 1
      %s54 = scalar_select %p51, %s52, %s53
      %p57 = pneg %p51
      %p58 = scmp.eq.s32.totalorder %s21, 1
      %p59 = por %p57, %p58
      %p60 = scmp.ne.s32.totalorder %s52, %s55
      %p61 = scmp.eq.s32.totalorder %s21, 0
      %p62 = por %p60, %p61
      %p63 = scmp.ne.s32.totalorder %s52, %s55
      %p64 = scmp.eq.s32.totalorder %s26, 1
      %p65 = por %p63, %p64
      %p66 = scmp.ne.s32.totalorder %s55, %s56
      %p67 = scmp.eq.s32.totalorder %s26, 0
      %p68 = por %p66, %p67
      %p69 = scmp.ne.s32.totalorder %s55, %s56
      %p70 = scmp.eq.s32.totalorder %s27, 1
      %p71 = por %p69, %p70
      %p73 = scmp.ne.s32.totalorder %s56, %s72
      %p74 = scmp.eq.s32.totalorder %s27, 0
      %p75 = por %p73, %p74
      %s76 = ssub.s32 %s28, %s47
      %s77 = ssub.s32 %s30, %s39
      %s78 = sor.u32 %s76, %s77
      %p79 = scmp.eq.s32.totalorder %s78, 0
      %s81 = sadd.s32 %s80, 1
      %s82 = scalar_select %p79, %s80, %s81
      %p85 = pneg %p79
      %p86 = scmp.eq.s32.totalorder %s21, 1
      %p87 = por %p85, %p86
      %p88 = scmp.ne.s32.totalorder %s80, %s83
      %p89 = scmp.eq.s32.totalorder %s21, 0
      %p90 = por %p88, %p89
      %p91 = scmp.ne.s32.totalorder %s80, %s83
      %p92 = scmp.eq.s32.totalorder %s26, 1
      %p93 = por %p91, %p92
      %p94 = scmp.ne.s32.totalorder %s83, %s84
      %p95 = scmp.eq.s32.totalorder %s26, 0
      %p96 = por %p94, %p95
      %p97 = scmp.ne.s32.totalorder %s83, %s84
      %p98 = scmp.eq.s32.totalorder %s27, 1
      %p99 = por %p97, %p98
      %p101 = scmp.ne.s32.totalorder %s84, %s100
      %p102 = scmp.eq.s32.totalorder %s27, 0
      %p103 = por %p101, %p102
      %s105 = sadd.s32 %s104, 1
      %p108 = scmp.eq.s32.totalorder %s21, 1
      %p109 = scmp.ne.s32.totalorder %s104, %s106
      %p110 = scmp.eq.s32.totalorder %s21, 0
      %p111 = por %p109, %p110
      %p112 = scmp.ne.s32.totalorder %s104, %s106
      %p113 = scmp.eq.s32.totalorder %s26, 1
      %p114 = por %p112, %p113
      %p115 = scmp.ne.s32.totalorder %s106, %s107
      %p116 = scmp.eq.s32.totalorder %s26, 0
      %p117 = por %p115, %p116
      %p118 = scmp.ne.s32.totalorder %s106, %s107
      %p119 = scmp.eq.s32.totalorder %s27, 1
      %p120 = por %p118, %p119
      %p122 = scmp.ne.s32.totalorder %s107, %s121
      %p123 = scmp.eq.s32.totalorder %s27, 0
      %p124 = por %p122, %p123
      %s126 = sadd.s32 %s125, 1
      %p129 = scmp.eq.s32.totalorder %s21, 1
      %p130 = scmp.ne.s32.totalorder %s125, %s127
      %p131 = scmp.eq.s32.totalorder %s21, 0
      %p132 = por %p130, %p131
      %p133 = scmp.ne.s32.totalorder %s125, %s127
      %p134 = scmp.eq.s32.totalorder %s26, 1
      %p135 = por %p133, %p134
      %p136 = scmp.ne.s32.totalorder %s127, %s128
      %p137 = scmp.eq.s32.totalorder %s26, 0
      %p138 = por %p136, %p137
      %p139 = scmp.ne.s32.totalorder %s127, %s128
      %p140 = scmp.eq.s32.totalorder %s27, 1
      %p141 = por %p139, %p140
      %p143 = scmp.ne.s32.totalorder %s128, %s142
      %p144 = scmp.eq.s32.totalorder %s27, 0
      %p145 = por %p143, %p144
      %s147 = sadd.s32 %s146, 1
      %p150 = scmp.eq.s32.totalorder %s21, 1
      %p151 = scmp.ne.s32.totalorder %s146, %s148
      %p152 = scmp.eq.s32.totalorder %s21, 0
      %p153 = por %p151, %p152
      %p154 = scmp.ne.s32.totalorder %s146, %s148
      %p155 = scmp.eq.s32.totalorder %s26, 1
      %p156 = por %p154, %p155
      %p157 = scmp.ne.s32.totalorder %s148, %s149
      %p158 = scmp.eq.s32.totalorder %s26, 0
      %p159 = por %p157, %p158
      %p160 = scmp.ne.s32.totalorder %s148, %s149
      %p161 = scmp.eq.s32.totalorder %s27, 1
      %p162 = por %p160, %p161
      %p164 = scmp.ne.s32.totalorder %s149, %s163
      %p165 = scmp.eq.s32.totalorder %s27, 0
      %p166 = por %p164, %p165
      %s168 = sadd.s32 %s167, 1
      %p171 = scmp.eq.s32.totalorder %s21, 1
      %p172 = scmp.ne.s32.totalorder %s167, %s169
      %p173 = scmp.eq.s32.totalorder %s21, 0
      %p174 = por %p172, %p173
      %p175 = scmp.ne.s32.totalorder %s167, %s169
      %p176 = scmp.eq.s32.totalorder %s26, 1
      %p177 = por %p175, %p176
      %p178 = scmp.ne.s32.totalorder %s169, %s170
      %p179 = scmp.eq.s32.totalorder %s26, 0
      %p180 = por %p178, %p179
      %p181 = scmp.ne.s32.totalorder %s169, %s170
      %p182 = scmp.eq.s32.totalorder %s27, 1
      %p183 = por %p181, %p182
      %p185 = scmp.ne.s32.totalorder %s170, %s184
      %p186 = scmp.eq.s32.totalorder %s27, 0
      %p187 = por %p185, %p186
      %s189 = sadd.s32 %s188, 1
      %p192 = scmp.eq.s32.totalorder %s21, 1
      %p193 = scmp.ne.s32.totalorder %s188, %s190
      %p194 = scmp.eq.s32.totalorder %s21, 0
      %p195 = por %p193, %p194
      %p196 = scmp.ne.s32.totalorder %s188, %s190
      %p197 = scmp.eq.s32.totalorder %s26, 1
      %p198 = por %p196, %p197
      %p199 = scmp.ne.s32.totalorder %s190, %s191
      %p200 = scmp.eq.s32.totalorder %s26, 0
      %p201 = por %p199, %p200
      %p202 = scmp.ne.s32.totalorder %s190, %s191
      %p203 = scmp.eq.s32.totalorder %s27, 1
      %p204 = por %p202, %p203
      %p206 = scmp.ne.s32.totalorder %s191, %s205
      %p207 = scmp.eq.s32.totalorder %s27, 0
      %p208 = por %p206, %p207
      %s210 = sadd.s32 %s209, 1
      %p213 = scmp.eq.s32.totalorder %s21, 1
      %p214 = scmp.ne.s32.totalorder %s209, %s211
      %p215 = scmp.eq.s32.totalorder %s21, 0
      %p216 = por %p214, %p215
      %p217 = scmp.ne.s32.totalorder %s209, %s211
      %p218 = scmp.eq.s32.totalorder %s26, 1
      %p219 = por %p217, %p218
      %p220 = scmp.ne.s32.totalorder %s211, %s212
      %p221 = scmp.eq.s32.totalorder %s26, 0
      %p222 = por %p220, %p221
      %p223 = scmp.ne.s32.totalorder %s211, %s212
      %p224 = scmp.eq.s32.totalorder %s27, 1
      %p225 = por %p223, %p224
      %p227 = scmp.ne.s32.totalorder %s212, %s226
      %p228 = scmp.eq.s32.totalorder %s27, 0
      %p229 = por %p227, %p228
      %s231 = sadd.s32 %s230, 1
      %p234 = scmp.eq.s32.totalorder %s21, 1
      %p235 = scmp.ne.s32.totalorder %s230, %s232
      %p236 = scmp.eq.s32.totalorder %s21, 0
      %p237 = por %p235, %p236
      %p238 = scmp.ne.s32.totalorder %s230, %s232
      %p239 = scmp.eq.s32.totalorder %s26, 1
      %p240 = por %p238, %p239
      %p241 = scmp.ne.s32.totalorder %s232, %s233
      %p242 = scmp.eq.s32.totalorder %s26, 0
      %p243 = por %p241, %p242
      %p244 = scmp.ne.s32.totalorder %s232, %s233
      %p245 = scmp.eq.s32.totalorder %s27, 1
      %p246 = por %p244, %p245
      %p248 = scmp.ne.s32.totalorder %s233, %s247
      %p249 = scmp.eq.s32.totalorder %s27, 0
      %p250 = por %p248, %p249
      %s252 = sadd.s32 %s251, 1
      %p255 = scmp.eq.s32.totalorder %s21, 1
      %p256 = scmp.ne.s32.totalorder %s251, %s253
      %p257 = scmp.eq.s32.totalorder %s21, 0
      %p258 = por %p256, %p257
      %p259 = scmp.ne.s32.totalorder %s251, %s253
      %p260 = scmp.eq.s32.totalorder %s26, 1
      %p261 = por %p259, %p260
      %p262 = scmp.ne.s32.totalorder %s253, %s254
      %p263 = scmp.eq.s32.totalorder %s26, 0
      %p264 = por %p262, %p263
      %p265 = scmp.ne.s32.totalorder %s253, %s254
      %p266 = scmp.eq.s32.totalorder %s27, 1
      %p267 = por %p265, %p266
      %p269 = scmp.ne.s32.totalorder %s254, %s268
      %p270 = scmp.eq.s32.totalorder %s27, 0
      %p271 = por %p269, %p270
      %s272 = ssub.s32 %s28, %s47
      %s273 = ssub.s32 %s29, %s43
      %s274 = sor.u32 %s272, %s273
      %s275 = ssub.s32 %s30, %s39
      %s276 = sor.u32 %s274, %s275
      %p277 = scmp.eq.s32.totalorder %s276, 0
      %s279 = sadd.s32 %s278, 1
      %s280 = scalar_select %p277, %s278, %s279
      %p283 = pneg %p277
      %p284 = scmp.eq.s32.totalorder %s21, 1
      %p285 = por %p283, %p284
      %p286 = scmp.ne.s32.totalorder %s278, %s281
      %p287 = scmp.eq.s32.totalorder %s21, 0
      %p288 = por %p286, %p287
      %p289 = scmp.ne.s32.totalorder %s278, %s281
      %p290 = scmp.eq.s32.totalorder %s26, 1
      %p291 = por %p289, %p290
      %p292 = scmp.ne.s32.totalorder %s281, %s282
      %p293 = scmp.eq.s32.totalorder %s26, 0
      %p294 = por %p292, %p293
      %p295 = scmp.ne.s32.totalorder %s281, %s282
      %p296 = scmp.eq.s32.totalorder %s27, 1
      %p297 = por %p295, %p296
      %p299 = scmp.ne.s32.totalorder %s282, %s298
      %p300 = scmp.eq.s32.totalorder %s27, 0
      %p301 = por %p299, %p300
      %p302 = scmp.le.s32.totalorder 1, %s21
      %p303 = scmp.lt.s32.totalorder %s21, 3
      %p304 = pnand %p302, %p303
      %p305 = pneg %p304
      // Predicated region
      $region9: #{tpu_custom_call.1} parent=5 // pred_check
        _
      $region10: #{tpu_custom_call.1} parent=5 // pred_check_branch
        %307 = sbr.rel (%p304) target = $region12
      $region11: #{tpu_custom_call.1} parent=5 // pred_region
        %s308 = ssub.s32 %s21, 1
        // Predicated region
        $region13: #{tpu_custom_call.1} parent=11 // pred_check
          %p309 = pneg %p117
        $region14: #{tpu_custom_call.1} parent=11 // pred_check_branch
          %311 = sbr.rel (%p309) target = $region16
        $region15: #{tpu_custom_call.1} parent=11 // pred_region
          _
        $region16: #{tpu_custom_call.1} parent=11 // pred_fallthru
          _
        // Predicated region
        $region17: #{tpu_custom_call.1} parent=11 // pred_check
          %p312 = pneg %p138
        $region18: #{tpu_custom_call.1} parent=11 // pred_check_branch
          %314 = sbr.rel (%p312) target = $region20
        $region19: #{tpu_custom_call.1} parent=11 // pred_region
          _
        $region20: #{tpu_custom_call.1} parent=11 // pred_fallthru
          _
        // Predicated region
        $region21: #{tpu_custom_call.1} parent=11 // pred_check
          %p315 = pneg %p159
        $region22: #{tpu_custom_call.1} parent=11 // pred_check_branch
          %317 = sbr.rel (%p315) target = $region24
        $region23: #{tpu_custom_call.1} parent=11 // pred_region
          _
        $region24: #{tpu_custom_call.1} parent=11 // pred_fallthru
          _
        // Predicated region
        $region25: #{tpu_custom_call.1} parent=11 // pred_check
          %p318 = pneg %p180
        $region26: #{tpu_custom_call.1} parent=11 // pred_check_branch
          %320 = sbr.rel (%p318) target = $region28
        $region27: #{tpu_custom_call.1} parent=11 // pred_region
          _
        $region28: #{tpu_custom_call.1} parent=11 // pred_fallthru
          _
        // Predicated region
        $region29: #{tpu_custom_call.1} parent=11 // pred_check
          %p321 = pneg %p201
        $region30: #{tpu_custom_call.1} parent=11 // pred_check_branch
          %323 = sbr.rel (%p321) target = $region32
        $region31: #{tpu_custom_call.1} parent=11 // pred_region
          _
        $region32: #{tpu_custom_call.1} parent=11 // pred_fallthru
          _
        // Predicated region
        $region33: #{tpu_custom_call.1} parent=11 // pred_check
          %p324 = pneg %p222
        $region34: #{tpu_custom_call.1} parent=11 // pred_check_branch
          %326 = sbr.rel (%p324) target = $region36
        $region35: #{tpu_custom_call.1} parent=11 // pred_region
          _
        $region36: #{tpu_custom_call.1} parent=11 // pred_fallthru
          _
        // Predicated region
        $region37: #{tpu_custom_call.1} parent=11 // pred_check
          %p327 = pneg %p243
        $region38: #{tpu_custom_call.1} parent=11 // pred_check_branch
          %329 = sbr.rel (%p327) target = $region40
        $region39: #{tpu_custom_call.1} parent=11 // pred_region
          _
        $region40: #{tpu_custom_call.1} parent=11 // pred_fallthru
          _
        // Predicated region
        $region41: #{tpu_custom_call.1} parent=11 // pred_check
          %p330 = pneg %p264
        $region42: #{tpu_custom_call.1} parent=11 // pred_check_branch
          %332 = sbr.rel (%p330) target = $region44
        $region43: #{tpu_custom_call.1} parent=11 // pred_region
          _
        $region44: #{tpu_custom_call.1} parent=11 // pred_fallthru
          _
      $region12: #{tpu_custom_call.1} parent=5 // pred_fallthru
        _
      %p333 = scmp.lt.s32.totalorder %s21, 2
      // Predicated region
      $region45: #{tpu_custom_call.1} parent=5 // pred_check
        %p334 = pneg %p333
      $region46: #{tpu_custom_call.1} parent=5 // pred_check_branch
        %336 = sbr.rel (%p334) target = $region48
      $region47: #{tpu_custom_call.1} parent=5 // pred_region
        // Predicated region
        $region49: #{tpu_custom_call.1} parent=47 // pred_check
          %p337 = pneg %p62
        $region50: #{tpu_custom_call.1} parent=47 // pred_check_branch
          %339 = sbr.rel (%p337) target = $region52
        $region51: #{tpu_custom_call.1} parent=47 // pred_region
          %p340 = scmp.lt.s32.totalorder %s28, 1
          %s341 = scalar_select %p340, %s28, 1
          %p342 = scmp.lt.s32.totalorder %s29, 0
          %s343 = scalar_select %p342, %s29, 0
          %s344 = sadd.s32 %s343, %s341
          %s345 = smul.addr %s344, 8
          %s346 = scalar_lea.vmem %s0, %s345
        $region52: #{tpu_custom_call.1} parent=47 // pred_fallthru
          _
        // Predicated region
        $region53: #{tpu_custom_call.1} parent=47 // pred_check
          %p347 = pneg %p90
        $region54: #{tpu_custom_call.1} parent=47 // pred_check_branch
          %349 = sbr.rel (%p347) target = $region56
        $region55: #{tpu_custom_call.1} parent=47 // pred_region
          %p350 = scmp.lt.s32.totalorder %s28, 1
          %s351 = scalar_select %p350, %s28, 1
          %p352 = scmp.lt.s32.totalorder %s30, 0
          %s353 = scalar_select %p352, %s30, 0
          %s354 = sadd.s32 %s353, %s351
          %s355 = smul.addr %s354, 8
          %s356 = scalar_lea.vmem %s1, %s355
        $region56: #{tpu_custom_call.1} parent=47 // pred_fallthru
          _
      $region48: #{tpu_custom_call.1} parent=5 // pred_fallthru
        _
      %p357 = scmp.le.s32.totalorder 1, %s21
      %p358 = scmp.lt.s32.totalorder %s21, 3
      %p359 = pnand %p357, %p358
      %p360 = pneg %p359
      // Predicated region
      $region57: #{tpu_custom_call.1} parent=5 // pred_check
        _
      $region58: #{tpu_custom_call.1} parent=5 // pred_check_branch
        %362 = sbr.rel (%p359) target = $region60
      $region59: #{tpu_custom_call.1} parent=5 // pred_region
        %s363 = ssub.s32 %s21, 1
        %p364 = scmp.lt.s32.totalorder %s31, 1
        %s365 = scalar_select %p364, %s31, 1
        %p366 = scmp.lt.s32.totalorder %s32, 0
        %s367 = scalar_select %p366, %s32, 0
        %s368 = sadd.s32 %s367, %s365
        %s369 = smul.addr %s368, 8
        %s370 = scalar_lea.vmem %s0, %s369
        %p371 = pneg %p68
        %p372 = pneg %p65
        %p373 = scmp.lt.s32.totalorder %s31, 1
        %s374 = scalar_select %p373, %s31, 1
        %p375 = scmp.lt.s32.totalorder %s33, 0
        %s376 = scalar_select %p375, %s33, 0
        %s377 = sadd.s32 %s376, %s374
        %s378 = smul.addr %s377, 8
        %s379 = scalar_lea.vmem %s1, %s378
        %p380 = pneg %p96
        %p381 = pneg %p93
        %p382 = pneg %p117
        %p383 = pneg %p114
        %p384 = pneg %p138
        %p385 = pneg %p135
        %p386 = pneg %p159
        %p387 = pneg %p156
        %p388 = pneg %p180
        %p389 = pneg %p177
        %p390 = pneg %p201
        %p391 = pneg %p198
        %p392 = pneg %p222
        %p393 = pneg %p219
        %p394 = pneg %p243
        %p395 = pneg %p240
        %p396 = pneg %p264
        %p397 = pneg %p261
        %p398 = pneg %p294
        %p399 = pneg %p291
        %s400 = sand.u32 %s281, 1
        %s401 = scalar_lea.sflag [#allocation4], %s400
        %s402 = sand.u32 %s281, 1
        %s403 = smul.addr %s402, 8
        %s404 = scalar_lea.vmem [#allocation3], %s403
        %p405 = scmp.lt.s32.totalorder %s31, 1
        %s406 = scalar_select %p405, %s31, 1
        %p407 = scmp.lt.s32.totalorder %s32, 0
        %s408 = scalar_select %p407, %s32, 0
        %s409 = sadd.s32 %s408, %s406
        %s410 = smul.addr %s409, 8
        %s411 = scalar_lea.vmem %s0, %s410
        %p412 = scmp.lt.s32.totalorder %s31, 1
        %s413 = scalar_select %p412, %s31, 1
        %p414 = scmp.lt.s32.totalorder %s33, 0
        %s415 = scalar_select %p414, %s33, 0
        %s416 = sadd.s32 %s415, %s413
        %s417 = smul.addr %s416, 8
        %s418 = scalar_lea.vmem %s1, %s417
        %p420 = scmp.ge.s32.totalorder %s33, %s32
        // Predicated region
        $region61: #{tpu_custom_call.1} parent=59 // pred_check
          %p421 = pneg %p420
        $region62: #{tpu_custom_call.1} parent=59 // pred_check_branch
          %423 = sbr.rel (%p421) target = $region64
        $region63: #{tpu_custom_call.1} parent=59 // pred_region
          %v424 = vld [vmem:[%s411] sm:$0xff]
          %v425 = vld [vmem:[%s418] sm:$0xff]
          %v427 = vrot.slane %v424, 1
          %v428 = vrot.slane %v424, 2
          %v429 = vrot.slane %v424, 3
          %v430 = vrot.slane %v424, 4
          %v431 = vrot.slane %v424, 5
          %v432 = vrot.slane %v424, 6
          %v433 = vrot.slane %v424, 7
          %v434 = vperm.slane %v424, 0
          %v435 = vperm.slane %v427, 0
          %v436 = vperm.slane %v428, 0
          %v437 = vperm.slane %v429, 0
          %v438 = vperm.slane %v430, 0
          %v439 = vperm.slane %v431, 0
          %v440 = vperm.slane %v432, 0
          %v441 = vperm.slane %v433, 0
          %v450 = vsub.f32 %v434, %v425
          %v451 = vsub.f32 %v435, %v425
          %v452 = vsub.f32 %v436, %v425
          %v453 = vsub.f32 %v437, %v425
          %v454 = vsub.f32 %v438, %v425
          %v455 = vsub.f32 %v439, %v425
          %v456 = vsub.f32 %v440, %v425
          %v457 = vsub.f32 %v441, %v425
          %v458 = vand.u32 2147483647, %v450
          %v459 = vand.u32 2147483647, %v451
          %v460 = vand.u32 2147483647, %v452
          %v461 = vand.u32 2147483647, %v453
          %v462 = vand.u32 2147483647, %v454
          %v463 = vand.u32 2147483647, %v455
          %v464 = vand.u32 2147483647, %v456
          %v465 = vand.u32 2147483647, %v457
          %v466 = vpack.c.bf16 %v458, %v458
          %v467 = vpack.c.bf16 %v459, %v459
          %v468 = vpack.c.bf16 %v460, %v460
          %v469 = vpack.c.bf16 %v461, %v461
          %v470 = vpack.c.bf16 %v462, %v462
          %v471 = vpack.c.bf16 %v463, %v463
          %v472 = vpack.c.bf16 %v464, %v464
          %v473 = vpack.c.bf16 %v465, %v465
          %v474 = vld [vmem:[%s2] sm:$0xf]
          %v475 = vld [vmem:[%s2 + $0x4] sm:$0xf]
          %v476 = vld [vmem:[%s2 + $0x8] sm:$0xf]
          %v477 = vld [vmem:[%s2 + $0xc] sm:$0xf]
          %v478 = vld [vmem:[%s3] sm:$0x1]
          %v480 = vperm.slane %v478, 0
          %v490 = vunpack.c.l.b16 %v466
          %v491 = vunpack.c.l.b16 %v467
          %v492 = vunpack.c.l.b16 %v468
          %v493 = vunpack.c.l.b16 %v469
          %v494 = vunpack.c.l.b16 %v470
          %v495 = vunpack.c.l.b16 %v471
          %v496 = vunpack.c.l.b16 %v472
          %v497 = vunpack.c.l.b16 %v473
          %v498 = vpack.c.b16 %v491, %v490
          %v499 = vpack.c.b16 %v493, %v492
          %v500 = vpack.c.b16 %v495, %v494
          %v501 = vpack.c.b16 %v497, %v496
          %v506 = vunpack.c.l.b16 %v474
          %v507 = vunpack.c.l.b16 %v475
          %v508 = vunpack.c.l.b16 %v476
          %v509 = vunpack.c.l.b16 %v477
          %v510 = vpack.c.b16 %v507, %v506
          %v511 = vpack.c.b16 %v509, %v508
          %vm514 = vcmask 261120
          %v516 = vsel %vm514, %v498, 0
          %v519 = vsel %vm514, %v499, 0
          %v522 = vsel %vm514, %v500, 0
          %v525 = vsel %vm514, %v501, 0
          %527 = vmatpush.bf16.msra.mxu0 0
          %528 = vmatpush.bf16.msra.mxu0 0
          %529 = vmatpush.bf16.msra.mxu0 0
          %530 = vmatpush.bf16.msra.mxu0 0
          %531 = vmatpush.bf16.msra.mxu0 0
          %532 = vmatpush.bf16.msra.mxu0 0
          %533 = vmatpush.bf16.msra.mxu0 %v511
          %534 = vmatpush.bf16.msra.mxu0 %v510
          %535 = vmatmul.bf16.gmra.mxu0 %v516
          %v536 = vpop.f32.mrf.mxu0
          %v537 = vadd.f32 %v480, %v536
          %v538 = vpop.f32.mrf.mxu0
          %v539 = vadd.f32 %v480, %v538
          %540 = vmatmul.bf16.gmra.mxu0 %v519
          %v541 = vpop.f32.mrf.mxu0
          %v542 = vadd.f32 %v480, %v541
          %v543 = vpop.f32.mrf.mxu0
          %v544 = vadd.f32 %v480, %v543
          %545 = vmatmul.bf16.gmra.mxu0 %v522
          %v546 = vpop.f32.mrf.mxu0
          %v547 = vadd.f32 %v480, %v546
          %v548 = vpop.f32.mrf.mxu0
          %v549 = vadd.f32 %v480, %v548
          %550 = vmatmul.bf16.gmra.mxu0 %v525
          %v551 = vpop.f32.mrf.mxu0
          %v552 = vadd.f32 %v480, %v551
          %v553 = vpop.f32.mrf.mxu0
          %v554 = vadd.f32 %v480, %v553
          %555 = vdwg.mxu0
          %v556 = vmax.f32 %v537, 0.0
          %v557 = vmax.f32 %v539, 0.0
          %v558 = vmax.f32 %v542, 0.0
          %v559 = vmax.f32 %v544, 0.0
          %v560 = vmax.f32 %v547, 0.0
          %v561 = vmax.f32 %v549, 0.0
          %v562 = vmax.f32 %v552, 0.0
          %v563 = vmax.f32 %v554, 0.0
          %v564 = vpack.c.bf16 %v557, %v556
          %v565 = vpack.c.bf16 %v559, %v558
          %v566 = vpack.c.bf16 %v561, %v560
          %v567 = vpack.c.bf16 %v563, %v562
          %v568 = vld [vmem:[%s4] sm:$0xf]
          %v569 = vld [vmem:[%s4 + $0x4] sm:$0xf]
          %v570 = vld [vmem:[%s4 + $0x8] sm:$0xf]
          %v571 = vld [vmem:[%s4 + $0xc] sm:$0xf]
          %v572 = vld [vmem:[%s4 + $0x10] sm:$0xf]
          %v573 = vld [vmem:[%s4 + $0x14] sm:$0xf]
          %v574 = vld [vmem:[%s4 + $0x18] sm:$0xf]
          %v575 = vld [vmem:[%s4 + $0x1c] sm:$0xf]
          %v576 = vld [vmem:[%s5] sm:$0x1]
          %v578 = vperm.slane %v576, 0
          %v588 = vunpack.c.l.b16 %v568
          %v589 = vunpack.c.l.b16 %v569
          %v590 = vunpack.c.l.b16 %v570
          %v591 = vunpack.c.l.b16 %v571
          %v592 = vunpack.c.l.b16 %v572
          %v593 = vunpack.c.l.b16 %v573
          %v594 = vunpack.c.l.b16 %v574
          %v595 = vunpack.c.l.b16 %v575
          %v596 = vpack.c.b16 %v589, %v588
          %v597 = vpack.c.b16 %v591, %v590
          %v598 = vpack.c.b16 %v593, %v592
          %v599 = vpack.c.b16 %v595, %v594
          %vm604 = vcmask 523264
          %v606 = vsel %vm604, %v564, 0
          %v609 = vsel %vm604, %v565, 0
          %v612 = vsel %vm604, %v566, 0
          %v615 = vsel %vm604, %v567, 0
          %617 = vmatpush.bf16.msra.mxu0 0
          %618 = vmatpush.bf16.msra.mxu0 0
          %619 = vmatpush.bf16.msra.mxu0 0
          %620 = vmatpush.bf16.msra.mxu0 0
          %621 = vmatpush.bf16.msra.mxu0 %v599
          %622 = vmatpush.bf16.msra.mxu0 %v598
          %623 = vmatpush.bf16.msra.mxu0 %v597
          %624 = vmatpush.bf16.msra.mxu0 %v596
          %625 = vmatmul.bf16.gmra.mxu0 %v606
          %v626 = vpop.f32.mrf.mxu0
          %v627 = vadd.f32 %v578, %v626
          %v628 = vpop.f32.mrf.mxu0
          %v629 = vadd.f32 %v578, %v628
          %630 = vmatmul.bf16.gmra.mxu0 %v609
          %v631 = vpop.f32.mrf.mxu0
          %v632 = vadd.f32 %v578, %v631
          %v633 = vpop.f32.mrf.mxu0
          %v634 = vadd.f32 %v578, %v633
          %635 = vmatmul.bf16.gmra.mxu0 %v612
          %v636 = vpop.f32.mrf.mxu0
          %v637 = vadd.f32 %v578, %v636
          %v638 = vpop.f32.mrf.mxu0
          %v639 = vadd.f32 %v578, %v638
          %640 = vmatmul.bf16.gmra.mxu0 %v615
          %v641 = vpop.f32.mrf.mxu0
          %v642 = vadd.f32 %v578, %v641
          %v643 = vpop.f32.mrf.mxu0
          %v644 = vadd.f32 %v578, %v643
          %645 = vdwg.mxu0
          %v646 = vmax.f32 %v627, 0.0
          %v647 = vmax.f32 %v629, 0.0
          %v648 = vmax.f32 %v632, 0.0
          %v649 = vmax.f32 %v634, 0.0
          %v650 = vmax.f32 %v637, 0.0
          %v651 = vmax.f32 %v639, 0.0
          %v652 = vmax.f32 %v642, 0.0
          %v653 = vmax.f32 %v644, 0.0
          %v654 = vpack.c.bf16 %v647, %v646
          %v655 = vpack.c.bf16 %v649, %v648
          %v656 = vpack.c.bf16 %v651, %v650
          %v657 = vpack.c.bf16 %v653, %v652
          %v658 = vld [vmem:[%s6] sm:$0xf]
          %v659 = vld [vmem:[%s6 + $0x4] sm:$0xf]
          %v660 = vld [vmem:[%s6 + $0x8] sm:$0xf]
          %v661 = vld [vmem:[%s6 + $0xc] sm:$0xf]
          %v662 = vld [vmem:[%s7] sm:$0x1]
          %v664 = vperm.slane %v662, 0
          %v670 = vunpack.c.l.b16 %v658
          %v671 = vunpack.c.l.b16 %v659
          %v672 = vunpack.c.l.b16 %v660
          %v673 = vunpack.c.l.b16 %v661
          %v674 = vpack.c.b16 %v671, %v670
          %v675 = vpack.c.b16 %v673, %v672
          %v679 = vsel %vm514, %v654, 0
          %v682 = vsel %vm514, %v655, 0
          %v685 = vsel %vm514, %v656, 0
          %v688 = vsel %vm514, %v657, 0
          %690 = vmatpush.bf16.msra.mxu0 0
          %691 = vmatpush.bf16.msra.mxu0 0
          %692 = vmatpush.bf16.msra.mxu0 0
          %693 = vmatpush.bf16.msra.mxu0 0
          %694 = vmatpush.bf16.msra.mxu0 0
          %695 = vmatpush.bf16.msra.mxu0 0
          %696 = vmatpush.bf16.msra.mxu0 %v675
          %697 = vmatpush.bf16.msra.mxu0 %v674
          %698 = vmatmul.bf16.gmra.mxu0 %v679
          %v699 = vpop.f32.mrf.mxu0
          %v700 = vadd.f32 %v664, %v699
          %v701 = vpop.f32.mrf.mxu0
          %v702 = vadd.f32 %v664, %v701
          %703 = vmatmul.bf16.gmra.mxu0 %v682
          %v704 = vpop.f32.mrf.mxu0
          %v705 = vadd.f32 %v664, %v704
          %v706 = vpop.f32.mrf.mxu0
          %v707 = vadd.f32 %v664, %v706
          %708 = vmatmul.bf16.gmra.mxu0 %v685
          %v709 = vpop.f32.mrf.mxu0
          %v710 = vadd.f32 %v664, %v709
          %v711 = vpop.f32.mrf.mxu0
          %v712 = vadd.f32 %v664, %v711
          %713 = vmatmul.bf16.gmra.mxu0 %v688
          %v714 = vpop.f32.mrf.mxu0
          %v715 = vadd.f32 %v664, %v714
          %v716 = vpop.f32.mrf.mxu0
          %v717 = vadd.f32 %v664, %v716
          %718 = vdwg.mxu0
          %v719 = vmax.f32 %v700, 0.0
          %v720 = vmax.f32 %v702, 0.0
          %v721 = vmax.f32 %v705, 0.0
          %v722 = vmax.f32 %v707, 0.0
          %v723 = vmax.f32 %v710, 0.0
          %v724 = vmax.f32 %v712, 0.0
          %v725 = vmax.f32 %v715, 0.0
          %v726 = vmax.f32 %v717, 0.0
          %v727 = vld [vmem:[%s8] sm:$0x1]
          %v729 = vperm.slane %v727, 0
          %v731 = vmul.f32 %v719, %v729
          %v732 = vmul.f32 %v720, %v729
          %v733 = vmul.f32 %v721, %v729
          %v734 = vmul.f32 %v722, %v729
          %v735 = vmul.f32 %v723, %v729
          %v736 = vmul.f32 %v724, %v729
          %v737 = vmul.f32 %v725, %v729
          %v738 = vmul.f32 %v726, %v729
          %vm739 = vcmask 130048
          %v740 = vsel %vm739, %v731, 0.0
          %741 = vadd.xlane.f32.xlu0 %v740
          %v742 = vpop.xlane.xlu0 %741
          %v743 = vsel %vm739, %v732, 0.0
          %744 = vadd.xlane.f32.xlu0 %v743
          %v745 = vpop.xlane.xlu0 %744
          %v746 = vsel %vm739, %v733, 0.0
          %747 = vadd.xlane.f32.xlu0 %v746
          %v748 = vpop.xlane.xlu0 %747
          %v749 = vsel %vm739, %v734, 0.0
          %750 = vadd.xlane.f32.xlu0 %v749
          %v751 = vpop.xlane.xlu0 %750
          %v752 = vsel %vm739, %v735, 0.0
          %753 = vadd.xlane.f32.xlu0 %v752
          %v754 = vpop.xlane.xlu0 %753
          %v755 = vsel %vm739, %v736, 0.0
          %756 = vadd.xlane.f32.xlu0 %v755
          %v757 = vpop.xlane.xlu0 %756
          %v758 = vsel %vm739, %v737, 0.0
          %759 = vadd.xlane.f32.xlu0 %v758
          %v760 = vpop.xlane.xlu0 %759
          %v761 = vsel %vm739, %v738, 0.0
          %762 = vadd.xlane.f32.xlu0 %v761
          %v763 = vpop.xlane.xlu0 %762
          %v764 = vld [vmem:[#allocation2] sm:$0x1]
          %v766 = vperm.slane %v764, 0
          %v768 = vadd.f32 %v742, %v766
          %v769 = vadd.f32 %v745, %v766
          %v770 = vadd.f32 %v748, %v766
          %v771 = vadd.f32 %v751, %v766
          %v772 = vadd.f32 %v754, %v766
          %v773 = vadd.f32 %v757, %v766
          %v774 = vadd.f32 %v760, %v766
          %v775 = vadd.f32 %v763, %v766
          %784 = vset.pattern.permute.xlu0 0
          %785 = vperm.xlu0 %784, %v768
          %v786 = vpop.permute.xlu0 %785
          %787 = vset.pattern.permute.xlu0 0
          %788 = vperm.xlu0 %787, %v769
          %v789 = vpop.permute.xlu0 %788
          %790 = vset.pattern.permute.xlu0 0
          %791 = vperm.xlu0 %790, %v770
          %v792 = vpop.permute.xlu0 %791
          %793 = vset.pattern.permute.xlu0 0
          %794 = vperm.xlu0 %793, %v771
          %v795 = vpop.permute.xlu0 %794
          %796 = vset.pattern.permute.xlu0 0
          %797 = vperm.xlu0 %796, %v772
          %v798 = vpop.permute.xlu0 %797
          %799 = vset.pattern.permute.xlu0 0
          %800 = vperm.xlu0 %799, %v773
          %v801 = vpop.permute.xlu0 %800
          %802 = vset.pattern.permute.xlu0 0
          %803 = vperm.xlu0 %802, %v774
          %v804 = vpop.permute.xlu0 %803
          %805 = vset.pattern.permute.xlu0 0
          %806 = vperm.xlu0 %805, %v775
          %v807 = vpop.permute.xlu0 %806
          %v808 = vlaneseq
          %v809 = vand.u32 %v808, 127
          %v810 = vperm.slane %v786, %v809
          %v811 = vperm.slane %v789, %v809
          %v812 = vperm.slane %v792, %v809
          %v813 = vperm.slane %v795, %v809
          %v814 = vperm.slane %v798, %v809
          %v815 = vperm.slane %v801, %v809
          %v816 = vperm.slane %v804, %v809
          %v817 = vperm.slane %v807, %v809
          %vm818 = vcmask 1041409
          %v819 = vsel %vm818, %v811, %v810
          %vm820 = vcmask 1042434
          %v821 = vsel %vm820, %v812, %v819
          %vm822 = vcmask 1043459
          %v823 = vsel %vm822, %v813, %v821
          %vm824 = vcmask 1044484
          %v825 = vsel %vm824, %v814, %v823
          %vm826 = vcmask 1045509
          %v827 = vsel %vm826, %v815, %v825
          %vm828 = vcmask 1046534
          %v829 = vsel %vm828, %v816, %v827
          %vm830 = vcmask 1047559
          %v831 = vsel %vm830, %v817, %v829
          %vm833 = vcmask 64512
          %834 = vst.msk [vmem:[%s404] sm:$0xff] %vm833, %v831
        $region64: #{tpu_custom_call.1} parent=59 // pred_fallthru
          _
        %p835 = scmp.lt.s32.totalorder %s33, %s32
        // Predicated region
        $region65: #{tpu_custom_call.1} parent=59 // pred_check
          %p836 = pneg %p835
        $region66: #{tpu_custom_call.1} parent=59 // pred_check_branch
          %838 = sbr.rel (%p836) target = $region68
        $region67: #{tpu_custom_call.1} parent=59 // pred_region
          %vm839 = vcmask 64512
          %840 = vst.msk [vmem:[%s404] sm:$0xff] %vm839, 0.0
        $region68: #{tpu_custom_call.1} parent=59 // pred_fallthru
          _
        %s841 = sand.u32 %s281, 1
        %s842 = scalar_lea.sflag [#allocation4], %s841
        %s843 = sand.u32 %s281, 1
        %s844 = smul.addr %s843, 8
        %s845 = scalar_lea.vmem [#allocation3], %s844
        // Predicated region
        $region69: #{tpu_custom_call.1} parent=59 // pred_check
          %p846 = pneg %p291
        $region70: #{tpu_custom_call.1} parent=59 // pred_check_branch
          %848 = sbr.rel (%p846) target = $region72
        $region71: #{tpu_custom_call.1} parent=59 // pred_region
          %850 = vsyncadd %s842, 0
          %s851 = sadd.s32 %s33, %s32
          %s852 = sadd.s32 %s851, %s31
          %s853 = smul.addr %s852, 8
          %s854 = scalar_lea.hbm %s10, %s853
          %s856 = sshll.u32 %s845, 4
          %s857 = int_to_ptr.vmem [resolvable:$true] %s856
          %s858 = sshll.u32 %s854, 4
          %s859 = int_to_ptr.hbm [resolvable:$true] %s858
          %861 = dma.vmem_to_hbm [thread:$0]  %s857, 128, %s859, %s842
        $region72: #{tpu_custom_call.1} parent=59 // pred_fallthru
          _
      $region60: #{tpu_custom_call.1} parent=5 // pred_fallthru
        _
      %p862 = scmp.le.s32.totalorder 2, %s21
      // Predicated region
      $region73: #{tpu_custom_call.1} parent=5 // pred_check
        %p863 = pneg %p862
      $region74: #{tpu_custom_call.1} parent=5 // pred_check_branch
        %865 = sbr.rel (%p863) target = $region76
      $region75: #{tpu_custom_call.1} parent=5 // pred_region
        %s866 = ssub.s32 %s21, 2
        // Predicated region
        $region77: #{tpu_custom_call.1} parent=75 // pred_check
          %p867 = pneg %p297
        $region78: #{tpu_custom_call.1} parent=75 // pred_check_branch
          %869 = sbr.rel (%p867) target = $region80
        $region79: #{tpu_custom_call.1} parent=75 // pred_region
          %s870 = sand.u32 %s282, 1
          %s871 = scalar_lea.sflag [#allocation4], %s870
          %s872 = sand.u32 %s282, 1
          %s873 = smul.addr %s872, 8
          %s874 = scalar_lea.vmem [#allocation3], %s873
          %876 = dma.done %s871, 128
        $region80: #{tpu_custom_call.1} parent=75 // pred_fallthru
          _
      $region76: #{tpu_custom_call.1} parent=5 // pred_fallthru
        _
    $region6: #{tpu_custom_call.1} parent=1 // loop_footer
      %s25 = sadd.s32 1, %s21
    $region7: #{tpu_custom_call.1} parent=1 // loop_footer_branch
      %20 = sbr.rel target = $region3
    $region8: #{tpu_custom_call.1} parent=1 // loop_exit
      _
    %877 = vsyncpa [#allocation4], 1
    %s878 = scalar_lea.sflag [#allocation4], 1
    %879 = vsyncpa %s878, 1

</llo_original>
